<compile_context>
chip_gen: v6e
topology: v6e:2x2x1
jax: 0.10.0
libtpu: 0.0.40
codegen_flags: <defaults>
</compile_context>

<pallas_src>
import jax
import jax.numpy as jnp
from jax.experimental import pallas as pl
from jax.experimental.pallas import tpu as pltpu

_LANE = 128  # minimum lane / MXU alignment


def _round_up(x, m):
    return (x + m - 1) // m * m


def _tpu_generation():
    try:
        kind = jax.devices()[0].device_kind.lower()
    except Exception:
        return 6
    for marker, gen in (("v7", 7), ("v6", 6), ("v5", 5), ("v4", 4), ("v3", 3)):
        if marker in kind:
            return gen
    return 6


_TPU_GEN = _tpu_generation()
_HAS_BUFFERED = hasattr(pl, "Buffered")   # detected once, no per-call fallback
_WEIGHT_BUFFERS = 1 if _HAS_BUFFERED else 2


def _feature_pad(dim):
    """Pad granularity: 128 for tiny dims / v5e, 256 for large dims on v6e/v7x."""
    if dim <= _LANE or _TPU_GEN < 6:
        return _round_up(dim, _LANE)
    return _round_up(dim, 256)


def _mlp_kernel(x_ref, w1_ref, b1_ref, w2_ref, b2_ref, w3_ref, b3_ref, o_ref):
    # Layer 1: (tb, Ip) @ (Ip, Hp), f32 accumulate, +bias, ReLU.
    h1 = jnp.dot(x_ref[...], w1_ref[...], preferred_element_type=jnp.float32)
    h1 = jnp.maximum(h1 + b1_ref[...], 0.0).astype(w2_ref.dtype)
    # Layer 2: (tb, Hp) @ (Hp, Hp), +bias, ReLU.
    h2 = jnp.dot(h1, w2_ref[...], preferred_element_type=jnp.float32)
    h2 = jnp.maximum(h2 + b2_ref[...], 0.0).astype(w3_ref.dtype)
    # Layer 3: (tb, Hp) @ (Hp, Op) -- Op is lane-padded, stores are dense.
    out = jnp.dot(h2, w3_ref[...], preferred_element_type=jnp.float32) + b3_ref[...]
    o_ref[...] = out.astype(o_ref.dtype)


def prepare_params(params, compute_dtype=jnp.bfloat16):
    """One-time glue: transpose PyTorch-layout (out, in) weights to (in, out),
    zero-pad every feature dim (128/256 granularity), cast weights to the
    compute dtype (bf16 default). Biases stay f32 (added to the f32 accum)."""
    w1, b1, w2, b2, w3, b3 = params
    hid, inp = w1.shape
    out = w3.shape[0]
    i_p, h_p, o_p = _feature_pad(inp), _feature_pad(hid), _feature_pad(out)

    def pad2(m, rows, cols):
        return jnp.pad(m, ((0, rows - m.shape[0]), (0, cols - m.shape[1])))

    return dict(
        w1=pad2(w1.T, i_p, h_p).astype(compute_dtype),
        b1=jnp.pad(b1, (0, h_p - hid)).reshape(1, h_p).astype(jnp.float32),
        w2=pad2(w2.T, h_p, h_p).astype(compute_dtype),
        b2=jnp.pad(b2, (0, h_p - hid)).reshape(1, h_p).astype(jnp.float32),
        w3=pad2(w3.T, h_p, o_p).astype(compute_dtype),
        b3=jnp.pad(b3, (0, o_p - out)).reshape(1, o_p).astype(jnp.float32),
        logical=(inp, hid, out),
        compute_dtype=compute_dtype,
    )


def _pick_tile_b(batch8, i_p, h_p, o_p, cd_bytes, resident_weight_bytes):
    """Pick a batch tile among divisors of the 8-rounded batch.

    v7x: >= 2 grid steps per TensorCore (grid >= 4) when batch allows.
    v5e/v6e: single grid step when the whole problem is small (1 TC, no
    parallelism to gain, per-step overhead dominates at these sizes)."""
    if _TPU_GEN >= 7:
        budget = 24 << 20
        min_grid = 4
    else:
        budget = 64 << 20
        min_grid = 2
        whole = (resident_weight_bytes
                 + batch8 * (i_p + o_p) * cd_bytes
                 + 2 * batch8 * h_p * 4)
        if batch8 <= 512 and whole <= (8 << 20):
            return batch8  # grid = 1
    for t in (512, 256, 128, 64, 32, 16, 8):
        if batch8 % t or batch8 < min_grid * t:
            continue
        act = 2 * t * (i_p + o_p) * cd_bytes   # double-buffered x / out tiles
        interm = 2 * t * h_p * 4               # live f32 h1 / h2
        if resident_weight_bytes + act + interm <= budget:
            return t
    return 8


def mlp_forward(x, prepared, *, tile_b=None):
    """Fused 3-layer MLP forward. x: (B, input_size); `prepared` from prepare_params()."""
    w1, b1, w2, b2, w3, b3 = (prepared[k] for k in ("w1", "b1", "w2", "b2", "w3", "b3"))
    in_size, _, out_size = prepared["logical"]
    cdt = prepared["compute_dtype"]
    cd_bytes = jnp.dtype(cdt).itemsize

    batch = x.shape[0]
    i_p, h_p = w1.shape
    o_p = w3.shape[1]

    weight_bytes = (i_p * h_p + h_p * h_p + h_p * o_p) * cd_bytes + (2 * h_p + o_p) * 4
    resident = _WEIGHT_BUFFERS * weight_bytes

    b8 = _round_up(batch, 8)
    if tile_b is None:
        tile_b = _pick_tile_b(b8, i_p, h_p, o_p, cd_bytes, resident)
    b_p = _round_up(b8, tile_b)          # == b8 whenever tile_b divides b8 (normal case)
    grid = (b_p // tile_b,)

    tile_bytes = 2 * tile_b * (i_p + o_p) * cd_bytes + 2 * tile_b * h_p * 4
    cap = (48 << 20) if _TPU_GEN >= 7 else (96 << 20)
    need = resident + tile_bytes + (2 << 20)   # ~2 MiB headroom for Mosaic scratch
    if need > cap:
        # TODO(synk): add a K-tiled grid axis (+ pl.when-initialized f32 accumulator)
        # so hidden sizes whose resident weights exceed VMEM still compile.
        raise ValueError(
            f"Resident-weight MLP needs ~{need >> 20} MiB VMEM but only "
            f"{cap >> 20} MiB is budgeted on this TPU generation (gen {_TPU_GEN}).")
    vmem_limit = int(min(max(need, 16 << 20), cap))

    # Zero-pad batch rows (multiple of 8/tile) and feature lanes. Padded weight
    # rows/cols and bias lanes are zero, so padded lanes stay zero through the
    # ReLUs and the final slice is exact.
    x_p = jnp.pad(x, ((0, b_p - batch), (0, i_p - in_size))).astype(cdt)

    cost = pl.CostEstimate(
        flops=2 * b_p * (i_p * h_p + h_p * h_p + h_p * o_p),
        transcendentals=0,
        bytes_accessed=b_p * i_p * cd_bytes + b_p * o_p * cd_bytes + weight_bytes,
    )

    # Weights/biases are grid-invariant: keep a single resident VMEM copy.
    w_kwargs = dict(pipeline_mode=pl.Buffered(1)) if _HAS_BUFFERED else {}
    in_specs = [
        pl.BlockSpec((tile_b, i_p), lambda i: (i, 0)),            # x tile (pipelined)
        pl.BlockSpec((i_p, h_p), lambda i: (0, 0), **w_kwargs),   # w1 (resident)
        pl.BlockSpec((1, h_p), lambda i: (0, 0), **w_kwargs),     # b1
        pl.BlockSpec((h_p, h_p), lambda i: (0, 0), **w_kwargs),   # w2
        pl.BlockSpec((1, h_p), lambda i: (0, 0), **w_kwargs),     # b2
        pl.BlockSpec((h_p, o_p), lambda i: (0, 0), **w_kwargs),   # w3
        pl.BlockSpec((1, o_p), lambda i: (0, 0), **w_kwargs),     # b3
    ]
    out_p = pl.pallas_call(
        _mlp_kernel,
        out_shape=jax.ShapeDtypeStruct((b_p, o_p), cdt),
        grid_spec=pltpu.PrefetchScalarGridSpec(
            num_scalar_prefetch=0,
            grid=grid,
            in_specs=in_specs,
            out_specs=pl.BlockSpec((tile_b, o_p), lambda i: (i, 0)),
        ),
        compiler_params=pltpu.CompilerParams(
            dimension_semantics=("parallel",),
            vmem_limit_bytes=vmem_limit,
        ),
        cost_estimate=cost,
    )(x_p, w1, b1, w2, b2, w3, b3)

    return out_p[:batch, :out_size].astype(jnp.float32)


def init_params(key, input_size, hidden_size, output_size=1):
    """Deterministic init mimicking nn.Linear's U(-1/sqrt(fan_in), 1/sqrt(fan_in))."""
    ks = jax.random.split(key, 6)

    def lin(kw, kb, fan_in, fan_out):
        bound = 1.0 / jnp.sqrt(float(fan_in))
        w = jax.random.uniform(kw, (fan_out, fan_in), jnp.float32, -bound, bound)
        b = jax.random.uniform(kb, (fan_out,), jnp.float32, -bound, bound)
        return w, b

    w1, b1 = lin(ks[0], ks[1], input_size, hidden_size)
    w2, b2 = lin(ks[2], ks[3], hidden_size, hidden_size)
    w3, b3 = lin(ks[4], ks[5], hidden_size, output_size)
    return (w1, b1, w2, b2, w3, b3)


def reference_forward(x, params):
    w1, b1, w2, b2, w3, b3 = params
    h = jnp.maximum(x @ w1.T + b1, 0.0)
    h = jnp.maximum(h @ w2.T + b2, 0.0)
    return h @ w3.T + b3


if __name__ == "__main__":
    key = jax.random.PRNGKey(0)
    k_x, k_p = jax.random.split(key)

    # Small shapes consistent with the module; features get lane-padded to 128.
    batch, input_size, hidden_size, output_size = 64, 16, 32, 1
    x = jax.random.normal(k_x, (batch, input_size), jnp.float32)
    params = init_params(k_p, input_size, hidden_size, output_size)
    ref = reference_forward(x, params)

    # f32 compute path: matches reference tightly.
    out_f32 = jax.block_until_ready(mlp_forward(x, prepare_params(params, jnp.float32)))
    assert out_f32.shape == (batch, output_size), out_f32.shape
    assert jnp.allclose(out_f32, ref, atol=1e-5, rtol=1e-5), "f32 mismatch vs. reference"

    # Default bf16-compute path (f32 MXU accumulation + f32 biases retained).
    out_bf16 = jax.block_until_ready(mlp_forward(x, prepare_params(params)))
    assert out_bf16.shape == (batch, output_size), out_bf16.shape
    assert jnp.allclose(out_bf16, ref, atol=5e-2, rtol=5e-2), "bf16 mismatch vs. reference"

    print("KERNEL_OK")
</pallas_src>

<mosaic_0001>
module attributes {stable_mosaic.version = 11 : i64} {
  func.func @_mlp_kernel(%arg0: i32, %arg1: memref<64x128xf32, #tpu.memory_space<vmem>>, %arg2: memref<128x128xf32, #tpu.memory_space<vmem>>, %arg3: memref<1x128xf32, #tpu.memory_space<vmem>>, %arg4: memref<128x128xf32, #tpu.memory_space<vmem>>, %arg5: memref<1x128xf32, #tpu.memory_space<vmem>>, %arg6: memref<128x128xf32, #tpu.memory_space<vmem>>, %arg7: memref<1x128xf32, #tpu.memory_space<vmem>>, %arg8: memref<64x128xf32, #tpu.memory_space<vmem>>) attributes {dimension_semantics = [#tpu.dimension_semantics<parallel>], iteration_bounds = array<i64: 1>, scalar_prefetch = 0 : i64, scratch_operands = 0 : i64, tpu.core_type = #tpu.core_type<tc>, window_params = [{transform_indices = @transform_0, window_bounds = array<i64: 64, 128>}, {pipeline_mode = #tpu.pipeline_mode<synchronous>, transform_indices = @transform_1, window_bounds = array<i64: 128, 128>}, {pipeline_mode = #tpu.pipeline_mode<synchronous>, transform_indices = @transform_2, window_bounds = array<i64: 1, 128>}, {pipeline_mode = #tpu.pipeline_mode<synchronous>, transform_indices = @transform_3, window_bounds = array<i64: 128, 128>}, {pipeline_mode = #tpu.pipeline_mode<synchronous>, transform_indices = @transform_4, window_bounds = array<i64: 1, 128>}, {pipeline_mode = #tpu.pipeline_mode<synchronous>, transform_indices = @transform_5, window_bounds = array<i64: 128, 128>}, {pipeline_mode = #tpu.pipeline_mode<synchronous>, transform_indices = @transform_6, window_bounds = array<i64: 1, 128>}, {transform_indices = @transform_7, window_bounds = array<i64: 64, 128>}]} {
    %c0 = arith.constant 0 : index
    %c0_0 = arith.constant 0 : index
    %0 = vector.load %arg1[%c0, %c0_0] : memref<64x128xf32, #tpu.memory_space<vmem>>, vector<64x128xf32>
    %c0_1 = arith.constant 0 : index
    %c0_2 = arith.constant 0 : index
    %1 = vector.load %arg2[%c0_1, %c0_2] : memref<128x128xf32, #tpu.memory_space<vmem>>, vector<128x128xf32>
    %cst = arith.constant dense<0.000000e+00> : vector<64x128xf32>
    %2 = tpu.matmul %0, %1, %cst {dimension_numbers = #tpu.dot_dimension_numbers<[1], [0], [0], [1], [0, 0, 1, 1], [], []>} : vector<64x128xf32>, vector<128x128xf32>, vector<64x128xf32> -> vector<64x128xf32>
    %c0_3 = arith.constant 0 : index
    %c0_4 = arith.constant 0 : index
    %3 = vector.load %arg3[%c0_3, %c0_4] : memref<1x128xf32, #tpu.memory_space<vmem>>, vector<1x128xf32>
    %4 = vector.broadcast %3 : vector<1x128xf32> to vector<64x128xf32>
    %5 = arith.addf %2, %4 : vector<64x128xf32>
    %cst_5 = arith.constant 0.000000e+00 : f32
    %6 = vector.broadcast %cst_5 : f32 to vector<64x128xf32>
    %7 = arith.maximumf %5, %6 : vector<64x128xf32>
    %c0_6 = arith.constant 0 : index
    %c0_7 = arith.constant 0 : index
    %8 = vector.load %arg4[%c0_6, %c0_7] : memref<128x128xf32, #tpu.memory_space<vmem>>, vector<128x128xf32>
    %cst_8 = arith.constant dense<0.000000e+00> : vector<64x128xf32>
    %9 = tpu.matmul %7, %8, %cst_8 {dimension_numbers = #tpu.dot_dimension_numbers<[1], [0], [0], [1], [0, 0, 1, 1], [], []>} : vector<64x128xf32>, vector<128x128xf32>, vector<64x128xf32> -> vector<64x128xf32>
    %c0_9 = arith.constant 0 : index
    %c0_10 = arith.constant 0 : index
    %10 = vector.load %arg5[%c0_9, %c0_10] : memref<1x128xf32, #tpu.memory_space<vmem>>, vector<1x128xf32>
    %11 = vector.broadcast %10 : vector<1x128xf32> to vector<64x128xf32>
    %12 = arith.addf %9, %11 : vector<64x128xf32>
    %cst_11 = arith.constant 0.000000e+00 : f32
    %13 = vector.broadcast %cst_11 : f32 to vector<64x128xf32>
    %14 = arith.maximumf %12, %13 : vector<64x128xf32>
    %c0_12 = arith.constant 0 : index
    %c0_13 = arith.constant 0 : index
    %15 = vector.load %arg6[%c0_12, %c0_13] : memref<128x128xf32, #tpu.memory_space<vmem>>, vector<128x128xf32>
    %cst_14 = arith.constant dense<0.000000e+00> : vector<64x128xf32>
    %16 = tpu.matmul %14, %15, %cst_14 {dimension_numbers = #tpu.dot_dimension_numbers<[1], [0], [0], [1], [0, 0, 1, 1], [], []>} : vector<64x128xf32>, vector<128x128xf32>, vector<64x128xf32> -> vector<64x128xf32>
    %c0_15 = arith.constant 0 : index
    %c0_16 = arith.constant 0 : index
    %17 = vector.load %arg7[%c0_15, %c0_16] : memref<1x128xf32, #tpu.memory_space<vmem>>, vector<1x128xf32>
    %18 = vector.broadcast %17 : vector<1x128xf32> to vector<64x128xf32>
    %19 = arith.addf %16, %18 : vector<64x128xf32>
    %c0_17 = arith.constant 0 : index
    %c0_18 = arith.constant 0 : index
    %20 = vector.load %arg8[%c0_17, %c0_18] : memref<64x128xf32, #tpu.memory_space<vmem>>, vector<64x128xf32>
    tpu.vector_store %arg8[%c0_17, %c0_18], %19 {strides = array<i32>} : memref<64x128xf32, #tpu.memory_space<vmem>>, vector<64x128xf32>,
    return
  }
  func.func @transform_0(%arg0: i32) -> (i32, i32) {
    %c0_i32 = arith.constant 0 : i32
    %c0_i32_0 = arith.constant 0 : i32
    return %arg0, %c0_i32 : i32, i32
  }
  func.func @transform_1(%arg0: i32) -> (i32, i32) {
    %c0_i32 = arith.constant 0 : i32
    %c0_i32_0 = arith.constant 0 : i32
    %c0_i32_1 = arith.constant 0 : i32
    return %c0_i32, %c0_i32_0 : i32, i32
  }
  func.func @transform_2(%arg0: i32) -> (i32, i32) {
    %c0_i32 = arith.constant 0 : i32
    %c0_i32_0 = arith.constant 0 : i32
    %c0_i32_1 = arith.constant 0 : i32
    return %c0_i32, %c0_i32_0 : i32, i32
  }
  func.func @transform_3(%arg0: i32) -> (i32, i32) {
    %c0_i32 = arith.constant 0 : i32
    %c0_i32_0 = arith.constant 0 : i32
    %c0_i32_1 = arith.constant 0 : i32
    return %c0_i32, %c0_i32_0 : i32, i32
  }
  func.func @transform_4(%arg0: i32) -> (i32, i32) {
    %c0_i32 = arith.constant 0 : i32
    %c0_i32_0 = arith.constant 0 : i32
    %c0_i32_1 = arith.constant 0 : i32
    return %c0_i32, %c0_i32_0 : i32, i32
  }
  func.func @transform_5(%arg0: i32) -> (i32, i32) {
    %c0_i32 = arith.constant 0 : i32
    %c0_i32_0 = arith.constant 0 : i32
    %c0_i32_1 = arith.constant 0 : i32
    return %c0_i32, %c0_i32_0 : i32, i32
  }
  func.func @transform_6(%arg0: i32) -> (i32, i32) {
    %c0_i32 = arith.constant 0 : i32
    %c0_i32_0 = arith.constant 0 : i32
    %c0_i32_1 = arith.constant 0 : i32
    return %c0_i32, %c0_i32_0 : i32, i32
  }
  func.func @transform_7(%arg0: i32) -> (i32, i32) {
    %c0_i32 = arith.constant 0 : i32
    %c0_i32_0 = arith.constant 0 : i32
    return %arg0, %c0_i32 : i32, i32
  }
}

</mosaic_0001>

<llo_original>
// kernel: tpu_custom_call.1
$region0: #{tpu_custom_call.1}
  #allocation0 [shape = 'u32[]', space=smem, size = 0x4, offset = 0x4, fixed_abs, tag = 'smem constant byte address 0x4 - core index']
  #allocation1 [shape = 'u32[144,128]{1,0:T(1,128)}', space=vmem, size = 0x12000, scoped, tag = 'internal scratch']
  %s0 = inlined_call_operand.hbm [shape: f32[64,128], index: 0, kind: input, shape index: {}]
  %s1 = inlined_call_operand.hbm [shape: f32[128,128], index: 1, kind: input, shape index: {}]
  %s2 = inlined_call_operand.vmem [shape: f32[1,128], index: 2, kind: input, shape index: {}]
  %s3 = inlined_call_operand.hbm [shape: f32[128,128], index: 3, kind: input, shape index: {}]
  %s4 = inlined_call_operand.vmem [shape: f32[1,128], index: 4, kind: input, shape index: {}]
  %s5 = inlined_call_operand.hbm [shape: f32[128,128], index: 5, kind: input, shape index: {}]
  %s6 = inlined_call_operand.vmem [shape: f32[1,128], index: 6, kind: input, shape index: {}]
  %s7 = inlined_call_operand.hbm [shape: f32[64,128], index: 7, kind: output, shape index: {}]
  %s8 = sld [smem:[#allocation0]]
  $region54: #{tpu_custom_call.1} parent=0
    _
  %s10 = ssub.s32 1, %s8
  %s11 = scalar_select 0, %s10, %s8
  $region1: #{tpu_custom_call.1} parent=0
    #allocation2 [shape = 'u8[32768]{0}', space=vmem, size = 0x8000, scoped, tag = 'input window, operand 0, single buffered']
    #allocation3 [shape = 's32[1]{0}', space=sflag, size = 0x4, scoped, tag = 'scoped memory for tpu_custom_call.1']
    #allocation4 [shape = 's32[1]{0}', space=sflag, size = 0x4, scoped, tag = 'scoped memory for tpu_custom_call.1']
    #allocation5 [shape = 'u8[65536]{0}', space=vmem, size = 0x10000, scoped, tag = 'input window, operand 1, single buffered']
    #allocation6 [shape = 's32[1]{0}', space=sflag, size = 0x4, scoped, tag = 'scoped memory for tpu_custom_call.1']
    #allocation7 [shape = 'u8[65536]{0}', space=vmem, size = 0x10000, scoped, tag = 'input window, operand 3, single buffered']
    #allocation8 [shape = 'u8[65536]{0}', space=vmem, size = 0x10000, scoped, tag = 'input window, operand 5, single buffered']
    #allocation9 [shape = 's32[1]{0}', space=sflag, size = 0x4, scoped, tag = 'scoped memory for tpu_custom_call.1']
    #allocation10 [shape = 'u8[32768]{0}', space=vmem, size = 0x8000, scoped, tag = 'output window, operand 0, single buffered']
    %12 = vsyncpa [#allocation3], 0
    %13 = vsyncpa [#allocation6], 0
    %14 = vsyncpa [#allocation9], 0
    %15 = vsyncpa [#allocation4], 0
    // Predicated region
    $region2: #{tpu_custom_call.1} parent=1 // pred_check
      _
    $region3: #{tpu_custom_call.1} parent=1 // pred_check_branch
      %17 = sbr.rel (0) target = $region5
    $region4: #{tpu_custom_call.1} parent=1 // pred_region
      %s19 = ssub.s32 1024, 1024
      %20 = vsyncadd [#allocation3], %s19
      %s21 = sshll.u32 [#allocation2], 4
      %s22 = int_to_ptr.vmem [resolvable:$true] %s21
      %27 = dma.hbm_to_vmem [thread:$0]  %s0, 1024, %s22, [#allocation3], 128, 128, 8
    $region5: #{tpu_custom_call.1} parent=1 // pred_fallthru
      _
    // Predicated region
    $region6: #{tpu_custom_call.1} parent=1 // pred_check
      _
    $region7: #{tpu_custom_call.1} parent=1 // pred_check_branch
      %29 = sbr.rel (0) target = $region9
    $region8: #{tpu_custom_call.1} parent=1 // pred_region
      %s31 = ssub.s32 2048, 2048
      %32 = vsyncadd [#allocation6], %s31
      %s33 = sshll.u32 [#allocation5], 4
      %s34 = int_to_ptr.vmem [resolvable:$true] %s33
      %39 = dma.hbm_to_vmem [thread:$0]  %s1, 2048, %s34, [#allocation6], 128, 128, 8
    $region9: #{tpu_custom_call.1} parent=1 // pred_fallthru
      _
    // Predicated region
    $region10: #{tpu_custom_call.1} parent=1 // pred_check
      _
    $region11: #{tpu_custom_call.1} parent=1 // pred_check_branch
      %41 = sbr.rel (0) target = $region13
    $region12: #{tpu_custom_call.1} parent=1 // pred_region
      _
    $region13: #{tpu_custom_call.1} parent=1 // pred_fallthru
      _
    // Predicated region
    $region14: #{tpu_custom_call.1} parent=1 // pred_check
      _
    $region15: #{tpu_custom_call.1} parent=1 // pred_check_branch
      %43 = sbr.rel (0) target = $region17
    $region16: #{tpu_custom_call.1} parent=1 // pred_region
      %s45 = ssub.s32 2048, 2048
      %46 = vsyncadd [#allocation6], %s45
      %s47 = sshll.u32 [#allocation7], 4
      %s48 = int_to_ptr.vmem [resolvable:$true] %s47
      %53 = dma.hbm_to_vmem [thread:$0]  %s3, 2048, %s48, [#allocation6], 128, 128, 8
    $region17: #{tpu_custom_call.1} parent=1 // pred_fallthru
      _
    // Predicated region
    $region18: #{tpu_custom_call.1} parent=1 // pred_check
      _
    $region19: #{tpu_custom_call.1} parent=1 // pred_check_branch
      %55 = sbr.rel (0) target = $region21
    $region20: #{tpu_custom_call.1} parent=1 // pred_region
      _
    $region21: #{tpu_custom_call.1} parent=1 // pred_fallthru
      _
    // Predicated region
    $region22: #{tpu_custom_call.1} parent=1 // pred_check
      _
    $region23: #{tpu_custom_call.1} parent=1 // pred_check_branch
      %57 = sbr.rel (0) target = $region25
    $region24: #{tpu_custom_call.1} parent=1 // pred_region
      %s59 = ssub.s32 2048, 2048
      %60 = vsyncadd [#allocation9], %s59
      %s61 = sshll.u32 [#allocation8], 4
      %s62 = int_to_ptr.vmem [resolvable:$true] %s61
      %67 = dma.hbm_to_vmem [thread:$0]  %s5, 2048, %s62, [#allocation9], 128, 128, 8
    $region25: #{tpu_custom_call.1} parent=1 // pred_fallthru
      _
    // Predicated region
    $region26: #{tpu_custom_call.1} parent=1 // pred_check
      _
    $region27: #{tpu_custom_call.1} parent=1 // pred_check_branch
      %69 = sbr.rel (0) target = $region29
    $region28: #{tpu_custom_call.1} parent=1 // pred_region
      _
    $region29: #{tpu_custom_call.1} parent=1 // pred_fallthru
      _
    // Predicated region
    $region30: #{tpu_custom_call.1} parent=1 // pred_check
      _
    $region31: #{tpu_custom_call.1} parent=1 // pred_check_branch
      %71 = sbr.rel (0) target = $region33
    $region32: #{tpu_custom_call.1} parent=1 // pred_region
      %72 = dma.done [#allocation3], 1024
    $region33: #{tpu_custom_call.1} parent=1 // pred_fallthru
      _
    // Predicated region
    $region34: #{tpu_custom_call.1} parent=1 // pred_check
      _
    $region35: #{tpu_custom_call.1} parent=1 // pred_check_branch
      %74 = sbr.rel (0) target = $region37
    $region36: #{tpu_custom_call.1} parent=1 // pred_region
      %75 = dma.done [#allocation6], 2048
    $region37: #{tpu_custom_call.1} parent=1 // pred_fallthru
      _
    // Predicated region
    $region38: #{tpu_custom_call.1} parent=1 // pred_check
      _
    $region39: #{tpu_custom_call.1} parent=1 // pred_check_branch
      %77 = sbr.rel (0) target = $region41
    $region40: #{tpu_custom_call.1} parent=1 // pred_region
      %78 = dma.done [#allocation6], 2048
    $region41: #{tpu_custom_call.1} parent=1 // pred_fallthru
      _
    // Predicated region
    $region42: #{tpu_custom_call.1} parent=1 // pred_check
      _
    $region43: #{tpu_custom_call.1} parent=1 // pred_check_branch
      %80 = sbr.rel (0) target = $region45
    $region44: #{tpu_custom_call.1} parent=1 // pred_region
      %81 = dma.done [#allocation9], 2048
    $region45: #{tpu_custom_call.1} parent=1 // pred_fallthru
      _
    %v82 = vld [vmem:[#allocation2] sm:$0xff]
    %v83 = vld [vmem:[#allocation2 + $0x8] sm:$0xff]
    %v84 = vld [vmem:[#allocation2 + $0x10] sm:$0xff]
    %v85 = vld [vmem:[#allocation2 + $0x18] sm:$0xff]
    %v86 = vld [vmem:[#allocation2 + $0x20] sm:$0xff]
    %v87 = vld [vmem:[#allocation2 + $0x28] sm:$0xff]
    %v88 = vld [vmem:[#allocation2 + $0x30] sm:$0xff]
    %v89 = vld [vmem:[#allocation2 + $0x38] sm:$0xff]
    %v90 = vld [vmem:[#allocation5] sm:$0xff]
    %v91 = vld [vmem:[#allocation5 + $0x8] sm:$0xff]
    %v92 = vld [vmem:[#allocation5 + $0x10] sm:$0xff]
    %v93 = vld [vmem:[#allocation5 + $0x18] sm:$0xff]
    %v94 = vld [vmem:[#allocation5 + $0x20] sm:$0xff]
    %v95 = vld [vmem:[#allocation5 + $0x28] sm:$0xff]
    %v96 = vld [vmem:[#allocation5 + $0x30] sm:$0xff]
    %v97 = vld [vmem:[#allocation5 + $0x38] sm:$0xff]
    %v98 = vld [vmem:[#allocation5 + $0x40] sm:$0xff]
    %v99 = vld [vmem:[#allocation5 + $0x48] sm:$0xff]
    %v100 = vld [vmem:[#allocation5 + $0x50] sm:$0xff]
    %v101 = vld [vmem:[#allocation5 + $0x58] sm:$0xff]
    %v102 = vld [vmem:[#allocation5 + $0x60] sm:$0xff]
    %v103 = vld [vmem:[#allocation5 + $0x68] sm:$0xff]
    %v104 = vld [vmem:[#allocation5 + $0x70] sm:$0xff]
    %v105 = vld [vmem:[#allocation5 + $0x78] sm:$0xff]
    %v106 = vld [vmem:[%s2] sm:$0x1]
    %v108 = vlaneseq
    %v109 = vshrl.u32 %v108, 7
    %v110 = vsub.s32 0, %v109
    %v111 = vrot.slane %v106, %v110
    %113 = vmatprep.subr.mxu0 0.0
    %114 = vmatpush1.msra.mxu0 %v105
    %115 = vmatprep.subr.mxu0 0.0
    %116 = vmatpush1.msra.mxu0 %v104
    %117 = vmatprep.subr.mxu0 0.0
    %118 = vmatpush1.msra.mxu0 %v103
    %119 = vmatprep.subr.mxu0 0.0
    %120 = vmatpush1.msra.mxu0 %v102
    %121 = vmatprep.subr.mxu0 0.0
    %122 = vmatpush1.msra.mxu0 %v101
    %123 = vmatprep.subr.mxu0 0.0
    %124 = vmatpush1.msra.mxu0 %v100
    %125 = vmatprep.subr.mxu0 0.0
    %126 = vmatpush1.msra.mxu0 %v99
    %127 = vmatprep.subr.mxu0 0.0
    %128 = vmatpush1.msra.mxu0 %v98
    %129 = vmatprep.subr.mxu0 0.0
    %130 = vmatpush1.msra.mxu0 %v97
    %131 = vmatprep.subr.mxu0 0.0
    %132 = vmatpush1.msra.mxu0 %v96
    %133 = vmatprep.subr.mxu0 0.0
    %134 = vmatpush1.msra.mxu0 %v95
    %135 = vmatprep.subr.mxu0 0.0
    %136 = vmatpush1.msra.mxu0 %v94
    %137 = vmatprep.subr.mxu0 0.0
    %138 = vmatpush1.msra.mxu0 %v93
    %139 = vmatprep.subr.mxu0 0.0
    %140 = vmatpush1.msra.mxu0 %v92
    %141 = vmatprep.subr.mxu0 0.0
    %142 = vmatpush1.msra.mxu0 %v91
    %143 = vmatprep.subr.mxu0 0.0
    %144 = vmatpush1.msra.mxu0 %v90
    %145 = vmatprep.subr.mxu0 0.0
    %146 = vmatpush2.msra.mxu0 0.0
    %147 = vmatprep.subr.mxu0 0.0
    %148 = vmatpush2.msra.mxu0 0.0
    %149 = vmatprep.subr.mxu0 0.0
    %150 = vmatpush2.msra.mxu0 0.0
    %151 = vmatprep.subr.mxu0 0.0
    %152 = vmatpush2.msra.mxu0 0.0
    %153 = vmatprep.subr.mxu0 0.0
    %154 = vmatpush2.msra.mxu0 0.0
    %155 = vmatprep.subr.mxu0 0.0
    %156 = vmatpush2.msra.mxu0 0.0
    %157 = vmatprep.subr.mxu0 0.0
    %158 = vmatpush2.msra.mxu0 0.0
    %159 = vmatprep.subr.mxu0 0.0
    %160 = vmatpush2.msra.mxu0 0.0
    %161 = vmatprep.subr.mxu0 0.0
    %162 = vmatpush2.msra.mxu0 0.0
    %163 = vmatprep.subr.mxu0 0.0
    %164 = vmatpush2.msra.mxu0 0.0
    %165 = vmatprep.subr.mxu0 0.0
    %166 = vmatpush2.msra.mxu0 0.0
    %167 = vmatprep.subr.mxu0 0.0
    %168 = vmatpush2.msra.mxu0 0.0
    %169 = vmatprep.subr.mxu0 0.0
    %170 = vmatpush2.msra.mxu0 0.0
    %171 = vmatprep.subr.mxu0 0.0
    %172 = vmatpush2.msra.mxu0 0.0
    %173 = vmatprep.subr.mxu0 0.0
    %174 = vmatpush2.msra.mxu0 0.0
    %175 = vmatprep.subr.mxu0 0.0
    %176 = vmatpush2.msra.mxu0 0.0
    %177 = vmatprep.mubr.f32.mxu0 0.0
    %178 = vmatmul.mubr.f32.gmra.mxu0 %v82
    %v179 = vpop.f32.mrf.mxu0
    %v180 = vadd.f32 %v111, %v179
    %v181 = vpop.f32.mrf.mxu0
    %182 = vmatprep.mubr.f32.mxu0 0.0
    %183 = vmatmul.mubr.f32.gmra.mxu0 %v83
    %v184 = vpop.f32.mrf.mxu0
    %v185 = vadd.f32 %v111, %v184
    %v186 = vpop.f32.mrf.mxu0
    %187 = vmatprep.mubr.f32.mxu0 0.0
    %188 = vmatmul.mubr.f32.gmra.mxu0 %v84
    %v189 = vpop.f32.mrf.mxu0
    %v190 = vadd.f32 %v111, %v189
    %v191 = vpop.f32.mrf.mxu0
    %192 = vmatprep.mubr.f32.mxu0 0.0
    %193 = vmatmul.mubr.f32.gmra.mxu0 %v85
    %v194 = vpop.f32.mrf.mxu0
    %v195 = vadd.f32 %v111, %v194
    %v196 = vpop.f32.mrf.mxu0
    %197 = vmatprep.mubr.f32.mxu0 0.0
    %198 = vmatmul.mubr.f32.gmra.mxu0 %v86
    %v199 = vpop.f32.mrf.mxu0
    %v200 = vadd.f32 %v111, %v199
    %v201 = vpop.f32.mrf.mxu0
    %202 = vmatprep.mubr.f32.mxu0 0.0
    %203 = vmatmul.mubr.f32.gmra.mxu0 %v87
    %v204 = vpop.f32.mrf.mxu0
    %v205 = vadd.f32 %v111, %v204
    %v206 = vpop.f32.mrf.mxu0
    %207 = vmatprep.mubr.f32.mxu0 0.0
    %208 = vmatmul.mubr.f32.gmra.mxu0 %v88
    %v209 = vpop.f32.mrf.mxu0
    %v210 = vadd.f32 %v111, %v209
    %v211 = vpop.f32.mrf.mxu0
    %212 = vmatprep.mubr.f32.mxu0 0.0
    %213 = vmatmul.mubr.f32.gmra.mxu0 %v89
    %v214 = vpop.f32.mrf.mxu0
    %v215 = vadd.f32 %v111, %v214
    %v216 = vpop.f32.mrf.mxu0
    %217 = vdwg.mxu0
    %v218 = vmax.f32 %v180, 0.0
    %v219 = vmax.f32 %v185, 0.0
    %v220 = vmax.f32 %v190, 0.0
    %v221 = vmax.f32 %v195, 0.0
    %v222 = vmax.f32 %v200, 0.0
    %v223 = vmax.f32 %v205, 0.0
    %v224 = vmax.f32 %v210, 0.0
    %v225 = vmax.f32 %v215, 0.0
    %v226 = vld [vmem:[#allocation7] sm:$0xff]
    %v227 = vld [vmem:[#allocation7 + $0x8] sm:$0xff]
    %v228 = vld [vmem:[#allocation7 + $0x10] sm:$0xff]
    %v229 = vld [vmem:[#allocation7 + $0x18] sm:$0xff]
    %v230 = vld [vmem:[#allocation7 + $0x20] sm:$0xff]
    %v231 = vld [vmem:[#allocation7 + $0x28] sm:$0xff]
    %v232 = vld [vmem:[#allocation7 + $0x30] sm:$0xff]
    %v233 = vld [vmem:[#allocation7 + $0x38] sm:$0xff]
    %v234 = vld [vmem:[#allocation7 + $0x40] sm:$0xff]
    %v235 = vld [vmem:[#allocation7 + $0x48] sm:$0xff]
    %v236 = vld [vmem:[#allocation7 + $0x50] sm:$0xff]
    %v237 = vld [vmem:[#allocation7 + $0x58] sm:$0xff]
    %v238 = vld [vmem:[#allocation7 + $0x60] sm:$0xff]
    %v239 = vld [vmem:[#allocation7 + $0x68] sm:$0xff]
    %v240 = vld [vmem:[#allocation7 + $0x70] sm:$0xff]
    %v241 = vld [vmem:[#allocation7 + $0x78] sm:$0xff]
    %v242 = vld [vmem:[%s4] sm:$0x1]
    %v244 = vlaneseq
    %v245 = vshrl.u32 %v244, 7
    %v246 = vsub.s32 0, %v245
    %v247 = vrot.slane %v242, %v246
    %249 = vmatprep.subr.mxu0 0.0
    %250 = vmatpush1.msra.mxu0 %v241
    %251 = vmatprep.subr.mxu0 0.0
    %252 = vmatpush1.msra.mxu0 %v240
    %253 = vmatprep.subr.mxu0 0.0
    %254 = vmatpush1.msra.mxu0 %v239
    %255 = vmatprep.subr.mxu0 0.0
    %256 = vmatpush1.msra.mxu0 %v238
    %257 = vmatprep.subr.mxu0 0.0
    %258 = vmatpush1.msra.mxu0 %v237
    %259 = vmatprep.subr.mxu0 0.0
    %260 = vmatpush1.msra.mxu0 %v236
    %261 = vmatprep.subr.mxu0 0.0
    %262 = vmatpush1.msra.mxu0 %v235
    %263 = vmatprep.subr.mxu0 0.0
    %264 = vmatpush1.msra.mxu0 %v234
    %265 = vmatprep.subr.mxu0 0.0
    %266 = vmatpush1.msra.mxu0 %v233
    %267 = vmatprep.subr.mxu0 0.0
    %268 = vmatpush1.msra.mxu0 %v232
    %269 = vmatprep.subr.mxu0 0.0
    %270 = vmatpush1.msra.mxu0 %v231
    %271 = vmatprep.subr.mxu0 0.0
    %272 = vmatpush1.msra.mxu0 %v230
    %273 = vmatprep.subr.mxu0 0.0
    %274 = vmatpush1.msra.mxu0 %v229
    %275 = vmatprep.subr.mxu0 0.0
    %276 = vmatpush1.msra.mxu0 %v228
    %277 = vmatprep.subr.mxu0 0.0
    %278 = vmatpush1.msra.mxu0 %v227
    %279 = vmatprep.subr.mxu0 0.0
    %280 = vmatpush1.msra.mxu0 %v226
    %281 = vmatprep.subr.mxu0 0.0
    %282 = vmatpush2.msra.mxu0 0.0
    %283 = vmatprep.subr.mxu0 0.0
    %284 = vmatpush2.msra.mxu0 0.0
    %285 = vmatprep.subr.mxu0 0.0
    %286 = vmatpush2.msra.mxu0 0.0
    %287 = vmatprep.subr.mxu0 0.0
    %288 = vmatpush2.msra.mxu0 0.0
    %289 = vmatprep.subr.mxu0 0.0
    %290 = vmatpush2.msra.mxu0 0.0
    %291 = vmatprep.subr.mxu0 0.0
    %292 = vmatpush2.msra.mxu0 0.0
    %293 = vmatprep.subr.mxu0 0.0
    %294 = vmatpush2.msra.mxu0 0.0
    %295 = vmatprep.subr.mxu0 0.0
    %296 = vmatpush2.msra.mxu0 0.0
    %297 = vmatprep.subr.mxu0 0.0
    %298 = vmatpush2.msra.mxu0 0.0
    %299 = vmatprep.subr.mxu0 0.0
    %300 = vmatpush2.msra.mxu0 0.0
    %301 = vmatprep.subr.mxu0 0.0
    %302 = vmatpush2.msra.mxu0 0.0
    %303 = vmatprep.subr.mxu0 0.0
    %304 = vmatpush2.msra.mxu0 0.0
    %305 = vmatprep.subr.mxu0 0.0
    %306 = vmatpush2.msra.mxu0 0.0
    %307 = vmatprep.subr.mxu0 0.0
    %308 = vmatpush2.msra.mxu0 0.0
    %309 = vmatprep.subr.mxu0 0.0
    %310 = vmatpush2.msra.mxu0 0.0
    %311 = vmatprep.subr.mxu0 0.0
    %312 = vmatpush2.msra.mxu0 0.0
    %313 = vmatprep.mubr.f32.mxu0 0.0
    %314 = vmatmul.mubr.f32.gmra.mxu0 %v218
    %v315 = vpop.f32.mrf.mxu0
    %v316 = vadd.f32 %v247, %v315
    %v317 = vpop.f32.mrf.mxu0
    %318 = vmatprep.mubr.f32.mxu0 0.0
    %319 = vmatmul.mubr.f32.gmra.mxu0 %v219
    %v320 = vpop.f32.mrf.mxu0
    %v321 = vadd.f32 %v247, %v320
    %v322 = vpop.f32.mrf.mxu0
    %323 = vmatprep.mubr.f32.mxu0 0.0
    %324 = vmatmul.mubr.f32.gmra.mxu0 %v220
    %v325 = vpop.f32.mrf.mxu0
    %v326 = vadd.f32 %v247, %v325
    %v327 = vpop.f32.mrf.mxu0
    %328 = vmatprep.mubr.f32.mxu0 0.0
    %329 = vmatmul.mubr.f32.gmra.mxu0 %v221
    %v330 = vpop.f32.mrf.mxu0
    %v331 = vadd.f32 %v247, %v330
    %v332 = vpop.f32.mrf.mxu0
    %333 = vmatprep.mubr.f32.mxu0 0.0
    %334 = vmatmul.mubr.f32.gmra.mxu0 %v222
    %v335 = vpop.f32.mrf.mxu0
    %v336 = vadd.f32 %v247, %v335
    %v337 = vpop.f32.mrf.mxu0
    %338 = vmatprep.mubr.f32.mxu0 0.0
    %339 = vmatmul.mubr.f32.gmra.mxu0 %v223
    %v340 = vpop.f32.mrf.mxu0
    %v341 = vadd.f32 %v247, %v340
    %v342 = vpop.f32.mrf.mxu0
    %343 = vmatprep.mubr.f32.mxu0 0.0
    %344 = vmatmul.mubr.f32.gmra.mxu0 %v224
    %v345 = vpop.f32.mrf.mxu0
    %v346 = vadd.f32 %v247, %v345
    %v347 = vpop.f32.mrf.mxu0
    %348 = vmatprep.mubr.f32.mxu0 0.0
    %349 = vmatmul.mubr.f32.gmra.mxu0 %v225
    %v350 = vpop.f32.mrf.mxu0
    %v351 = vadd.f32 %v247, %v350
    %v352 = vpop.f32.mrf.mxu0
    %353 = vdwg.mxu0
    %v354 = vmax.f32 %v316, 0.0
    %v355 = vmax.f32 %v321, 0.0
    %v356 = vmax.f32 %v326, 0.0
    %v357 = vmax.f32 %v331, 0.0
    %v358 = vmax.f32 %v336, 0.0
    %v359 = vmax.f32 %v341, 0.0
    %v360 = vmax.f32 %v346, 0.0
    %v361 = vmax.f32 %v351, 0.0
    %v362 = vld [vmem:[#allocation8] sm:$0xff]
    %v363 = vld [vmem:[#allocation8 + $0x8] sm:$0xff]
    %v364 = vld [vmem:[#allocation8 + $0x10] sm:$0xff]
    %v365 = vld [vmem:[#allocation8 + $0x18] sm:$0xff]
    %v366 = vld [vmem:[#allocation8 + $0x20] sm:$0xff]
    %v367 = vld [vmem:[#allocation8 + $0x28] sm:$0xff]
    %v368 = vld [vmem:[#allocation8 + $0x30] sm:$0xff]
    %v369 = vld [vmem:[#allocation8 + $0x38] sm:$0xff]
    %v370 = vld [vmem:[#allocation8 + $0x40] sm:$0xff]
    %v371 = vld [vmem:[#allocation8 + $0x48] sm:$0xff]
    %v372 = vld [vmem:[#allocation8 + $0x50] sm:$0xff]
    %v373 = vld [vmem:[#allocation8 + $0x58] sm:$0xff]
    %v374 = vld [vmem:[#allocation8 + $0x60] sm:$0xff]
    %v375 = vld [vmem:[#allocation8 + $0x68] sm:$0xff]
    %v376 = vld [vmem:[#allocation8 + $0x70] sm:$0xff]
    %v377 = vld [vmem:[#allocation8 + $0x78] sm:$0xff]
    %v378 = vld [vmem:[%s6] sm:$0x1]
    %v380 = vlaneseq
    %v381 = vshrl.u32 %v380, 7
    %v382 = vsub.s32 0, %v381
    %v383 = vrot.slane %v378, %v382
    %385 = vmatprep.subr.mxu0 0.0
    %386 = vmatpush1.msra.mxu0 %v377
    %387 = vmatprep.subr.mxu0 0.0
    %388 = vmatpush1.msra.mxu0 %v376
    %389 = vmatprep.subr.mxu0 0.0
    %390 = vmatpush1.msra.mxu0 %v375
    %391 = vmatprep.subr.mxu0 0.0
    %392 = vmatpush1.msra.mxu0 %v374
    %393 = vmatprep.subr.mxu0 0.0
    %394 = vmatpush1.msra.mxu0 %v373
    %395 = vmatprep.subr.mxu0 0.0
    %396 = vmatpush1.msra.mxu0 %v372
    %397 = vmatprep.subr.mxu0 0.0
    %398 = vmatpush1.msra.mxu0 %v371
    %399 = vmatprep.subr.mxu0 0.0
    %400 = vmatpush1.msra.mxu0 %v370
    %401 = vmatprep.subr.mxu0 0.0
    %402 = vmatpush1.msra.mxu0 %v369
    %403 = vmatprep.subr.mxu0 0.0
    %404 = vmatpush1.msra.mxu0 %v368
    %405 = vmatprep.subr.mxu0 0.0
    %406 = vmatpush1.msra.mxu0 %v367
    %407 = vmatprep.subr.mxu0 0.0
    %408 = vmatpush1.msra.mxu0 %v366
    %409 = vmatprep.subr.mxu0 0.0
    %410 = vmatpush1.msra.mxu0 %v365
    %411 = vmatprep.subr.mxu0 0.0
    %412 = vmatpush1.msra.mxu0 %v364
    %413 = vmatprep.subr.mxu0 0.0
    %414 = vmatpush1.msra.mxu0 %v363
    %415 = vmatprep.subr.mxu0 0.0
    %416 = vmatpush1.msra.mxu0 %v362
    %417 = vmatprep.subr.mxu0 0.0
    %418 = vmatpush2.msra.mxu0 0.0
    %419 = vmatprep.subr.mxu0 0.0
    %420 = vmatpush2.msra.mxu0 0.0
    %421 = vmatprep.subr.mxu0 0.0
    %422 = vmatpush2.msra.mxu0 0.0
    %423 = vmatprep.subr.mxu0 0.0
    %424 = vmatpush2.msra.mxu0 0.0
    %425 = vmatprep.subr.mxu0 0.0
    %426 = vmatpush2.msra.mxu0 0.0
    %427 = vmatprep.subr.mxu0 0.0
    %428 = vmatpush2.msra.mxu0 0.0
    %429 = vmatprep.subr.mxu0 0.0
    %430 = vmatpush2.msra.mxu0 0.0
    %431 = vmatprep.subr.mxu0 0.0
    %432 = vmatpush2.msra.mxu0 0.0
    %433 = vmatprep.subr.mxu0 0.0
    %434 = vmatpush2.msra.mxu0 0.0
    %435 = vmatprep.subr.mxu0 0.0
    %436 = vmatpush2.msra.mxu0 0.0
    %437 = vmatprep.subr.mxu0 0.0
    %438 = vmatpush2.msra.mxu0 0.0
    %439 = vmatprep.subr.mxu0 0.0
    %440 = vmatpush2.msra.mxu0 0.0
    %441 = vmatprep.subr.mxu0 0.0
    %442 = vmatpush2.msra.mxu0 0.0
    %443 = vmatprep.subr.mxu0 0.0
    %444 = vmatpush2.msra.mxu0 0.0
    %445 = vmatprep.subr.mxu0 0.0
    %446 = vmatpush2.msra.mxu0 0.0
    %447 = vmatprep.subr.mxu0 0.0
    %448 = vmatpush2.msra.mxu0 0.0
    %449 = vmatprep.mubr.f32.mxu0 0.0
    %450 = vmatmul.mubr.f32.gmra.mxu0 %v354
    %v451 = vpop.f32.mrf.mxu0
    %v452 = vadd.f32 %v383, %v451
    %v453 = vpop.f32.mrf.mxu0
    %454 = vmatprep.mubr.f32.mxu0 0.0
    %455 = vmatmul.mubr.f32.gmra.mxu0 %v355
    %v456 = vpop.f32.mrf.mxu0
    %v457 = vadd.f32 %v383, %v456
    %v458 = vpop.f32.mrf.mxu0
    %459 = vmatprep.mubr.f32.mxu0 0.0
    %460 = vmatmul.mubr.f32.gmra.mxu0 %v356
    %v461 = vpop.f32.mrf.mxu0
    %v462 = vadd.f32 %v383, %v461
    %v463 = vpop.f32.mrf.mxu0
    %464 = vmatprep.mubr.f32.mxu0 0.0
    %465 = vmatmul.mubr.f32.gmra.mxu0 %v357
    %v466 = vpop.f32.mrf.mxu0
    %v467 = vadd.f32 %v383, %v466
    %v468 = vpop.f32.mrf.mxu0
    %469 = vmatprep.mubr.f32.mxu0 0.0
    %470 = vmatmul.mubr.f32.gmra.mxu0 %v358
    %v471 = vpop.f32.mrf.mxu0
    %v472 = vadd.f32 %v383, %v471
    %v473 = vpop.f32.mrf.mxu0
    %474 = vmatprep.mubr.f32.mxu0 0.0
    %475 = vmatmul.mubr.f32.gmra.mxu0 %v359
    %v476 = vpop.f32.mrf.mxu0
    %v477 = vadd.f32 %v383, %v476
    %v478 = vpop.f32.mrf.mxu0
    %479 = vmatprep.mubr.f32.mxu0 0.0
    %480 = vmatmul.mubr.f32.gmra.mxu0 %v360
    %v481 = vpop.f32.mrf.mxu0
    %v482 = vadd.f32 %v383, %v481
    %v483 = vpop.f32.mrf.mxu0
    %484 = vmatprep.mubr.f32.mxu0 0.0
    %485 = vmatmul.mubr.f32.gmra.mxu0 %v361
    %v486 = vpop.f32.mrf.mxu0
    %v487 = vadd.f32 %v383, %v486
    %v488 = vpop.f32.mrf.mxu0
    %489 = vdwg.mxu0
    %490 = vst [vmem:[#allocation10] sm:$0xff] %v452
    %491 = vst [vmem:[#allocation10 + $0x8] sm:$0xff] %v457
    %492 = vst [vmem:[#allocation10 + $0x10] sm:$0xff] %v462
    %493 = vst [vmem:[#allocation10 + $0x18] sm:$0xff] %v467
    %494 = vst [vmem:[#allocation10 + $0x20] sm:$0xff] %v472
    %495 = vst [vmem:[#allocation10 + $0x28] sm:$0xff] %v477
    %496 = vst [vmem:[#allocation10 + $0x30] sm:$0xff] %v482
    %497 = vst [vmem:[#allocation10 + $0x38] sm:$0xff] %v487
    // Predicated region
    $region46: #{tpu_custom_call.1} parent=1 // pred_check
      _
    $region47: #{tpu_custom_call.1} parent=1 // pred_check_branch
      %499 = sbr.rel (0) target = $region49
    $region48: #{tpu_custom_call.1} parent=1 // pred_region
      %s501 = ssub.s32 1024, 1024
      %502 = vsyncadd [#allocation4], %s501
      %s503 = sshll.u32 [#allocation10], 4
      %s504 = int_to_ptr.vmem [resolvable:$true] %s503
      %509 = dma.vmem_to_hbm [thread:$0]  %s504, 1024, %s7, [#allocation4], 128, 128, 8
    $region49: #{tpu_custom_call.1} parent=1 // pred_fallthru
      _
    // Predicated region
    $region50: #{tpu_custom_call.1} parent=1 // pred_check
      _
    $region51: #{tpu_custom_call.1} parent=1 // pred_check_branch
      %511 = sbr.rel (0) target = $region53
    $region52: #{tpu_custom_call.1} parent=1 // pred_region
      %512 = dma.done [#allocation4], 1024
    $region53: #{tpu_custom_call.1} parent=1 // pred_fallthru
      _
    %513 = vsyncpa [#allocation3], 1
    %514 = vsyncpa [#allocation6], 1
    %515 = vsyncpa [#allocation9], 1
    %516 = vsyncpa [#allocation4], 1

</llo_original>
